<compile_context>
chip_gen: v7x
topology: tpu7x:2x2x1
jax: 0.10.0
libtpu: 0.0.40
codegen_flags: <defaults>
</compile_context>

<pallas_src>
import functools

import jax
import jax.numpy as jnp
from jax import lax
from jax.experimental import pallas as pl
from jax.experimental.pallas import tpu as pltpu


def _self_gat_kernel(x_ref, w_ref, er_ref, wra3_ref, idx_ref,
                     out_ref, h_scr, a_scr, *, alpha, concat, f_out, n_nodes):
    """One grid step processes one tile of edges; node-side work at first/last step."""
    e_step = pl.program_id(0)
    n = n_nodes
    te = idx_ref.shape[0]
    fp = w_ref.shape[1]

    # ---- step 0: node-level projections + accumulator init -------------------
    @pl.when(e_step == 0)
    def _():
        # Single MXU pass gives [h | p1 | p2 | 0...], p1 = h@a1^T, p2 = h@a2^T
        # (a1/a2 folded into W_big by the wrapper).
        h_scr[...] = jnp.dot(x_ref[...], w_ref[...],
                             preferred_element_type=jnp.float32)
        a_scr[...] = jnp.zeros_like(a_scr)

    p1 = h_scr[:, f_out:f_out + 1]        # (N, 1) per-node src-side score term
    p2 = h_scr[:, f_out + 1:f_out + 2]    # (N, 1) per-node dst-side score term

    # ---- per-edge-tile work ---------------------------------------------------
    src = idx_ref[:, 0:1]                 # (TE, 1) int32
    dst = idx_ref[:, 1:2]
    node_iota = lax.broadcasted_iota(jnp.int32, (te, n), 1)
    s_onehot = (src == node_iota).astype(jnp.float32)   # one-hot of edge[0]; pad edges -> all-zero row
    d_onehot = (dst == node_iota).astype(jnp.float32)   # one-hot of edge[1]

    # score_e = p1[src_e] + p2[dst_e] + edge_r_e@(Wr@a3^T) + a4*ew_e  (all folded)
    score = (jnp.dot(s_onehot, p1, preferred_element_type=jnp.float32)
             + jnp.dot(d_onehot, p2, preferred_element_type=jnp.float32)
             + jnp.dot(er_ref[...], wra3_ref[...],
                       preferred_element_type=jnp.float32))          # (TE, 1)
    lrelu = jnp.where(score > 0, score, alpha * score)               # LeakyReLU(alpha)
    edge_e = jnp.exp(-lrelu)
    # TODO(synk): training-mode dropout on edge_e not applied (eval semantics).

    # Accumulate dense coalesced attention matrix A[i,j] = sum_e edge_e[e]*[src=i]*[dst=j].
    # Single dot_general contracting over the edge axis (no transpose, no (E,F) gather).
    a_scr[...] += lax.dot_general(
        s_onehot * edge_e, d_onehot,
        dimension_numbers=(((0,), (0,)), ((), ())),
        preferred_element_type=jnp.float32)

    # ---- last step: SpecialSpmm + normalize + ELU, lane-dense store -----------
    @pl.when(e_step == pl.num_programs(0) - 1)
    def _():
        h_all = h_scr[...]
        col = lax.broadcasted_iota(jnp.int32, (n, fp), 1)
        # hb = [h | 1 | 0...]: the ones-column (index f_out) makes A @ hb produce both
        # the SpecialSpmm numerator and e_rowsum in one MXU pass.
        hb = jnp.where(col == f_out, 1.0,
                       jnp.where(col < f_out, h_all, 0.0))
        m = jnp.dot(a_scr[...], hb, preferred_element_type=jnp.float32)   # (N, Fp)
        inv = pl.reciprocal(m[:, f_out:f_out + 1] + 9e-15, approx=False)  # EUP, not VALU divide
        h_prime = m * inv
        if concat:
            # ELU (alpha=1); clamp inside exp so the untaken branch can't overflow.
            h_prime = jnp.where(h_prime > 0, h_prime,
                                jnp.exp(jnp.minimum(h_prime, 0.0)) - 1.0)
        out_ref[...] = h_prime.astype(out_ref.dtype)


def self_gat_forward(x, W, Wr, a, edge_index, edge_weight_road, edge_r,
                     *, alpha=0.2, concat=True, edge_tile=512):
    N, in_features = x.shape
    E = edge_index.shape[1]
    F_out = W.shape[1]
    r_in = Wr.shape[0]

    # --- parameter preprocessing (would be done once per layer in practice) ----
    a_flat = a.reshape(-1).astype(jnp.float32)
    a1 = a_flat[0:F_out]
    a2 = a_flat[F_out:2 * F_out]
    a3 = a_flat[2 * F_out:3 * F_out]
    a4 = a_flat[3 * F_out]

    # Lane-dense feature axis: pad out_features to a multiple of 128 and stash the
    # node-level attention projections (W@a1^T, W@a2^T) in the padding columns.
    Fp = ((F_out + 2 + 127) // 128) * 128
    W_big = jnp.zeros((in_features, Fp), jnp.float32)
    W_big = W_big.at[:, :F_out].set(W.astype(jnp.float32))
    W_big = W_big.at[:, F_out].set((W.astype(jnp.float32) @ a1))
    W_big = W_big.at[:, F_out + 1].set((W.astype(jnp.float32) @ a2))

    # Fold a3 into Wr; append a4 as the coefficient of the edge-weight column.
    wra3 = jnp.concatenate(
        [(Wr.astype(jnp.float32) @ a3).reshape(r_in, 1), a4.reshape(1, 1)],
        axis=0)                                                       # (r_in+1, 1)

    # --- edge-side operands -----------------------------------------------------
    src = edge_index[0].astype(jnp.int32)
    dst = edge_index[1].astype(jnp.int32)
    edge_idx = jnp.stack([src, dst], axis=1)                          # (E, 2)
    ew = edge_weight_road.astype(jnp.float32)
    er_aug = jnp.concatenate([edge_r.astype(jnp.float32), ew[:, None]], axis=1)  # (E, r_in+1)

    te = min(int(edge_tile), E)
    te = ((te + 7) // 8) * 8
    e_pad = ((E + te - 1) // te) * te
    if e_pad != E:
        pad = e_pad - E
        # Pad edges point at node index N (out of range) -> all-zero one-hot row -> dropped.
        edge_idx = jnp.concatenate([edge_idx, jnp.full((pad, 2), N, jnp.int32)], axis=0)
        er_aug = jnp.concatenate([er_aug, jnp.zeros((pad, r_in + 1), jnp.float32)], axis=0)
    n_steps = e_pad // te

    kernel = functools.partial(_self_gat_kernel, alpha=float(alpha),
                               concat=bool(concat), f_out=F_out, n_nodes=N)

    out_padded = pl.pallas_call(
        kernel,
        out_shape=jax.ShapeDtypeStruct((N, Fp), jnp.float32),
        grid_spec=pltpu.PrefetchScalarGridSpec(
            num_scalar_prefetch=0,
            grid=(n_steps,),
            in_specs=[
                pl.BlockSpec((N, in_features), lambda e: (0, 0)),   # x (resident)
                pl.BlockSpec((in_features, Fp), lambda e: (0, 0)),  # W_big (resident)
                pl.BlockSpec((te, r_in + 1), lambda e: (e, 0)),     # [edge_r | ew] tile
                pl.BlockSpec((r_in + 1, 1), lambda e: (0, 0)),      # [Wr@a3 ; a4] (resident)
                pl.BlockSpec((te, 2), lambda e: (e, 0)),            # [src | dst] tile
            ],
            out_specs=pl.BlockSpec((N, Fp), lambda e: (0, 0)),
            scratch_shapes=[
                pltpu.VMEM((N, Fp), jnp.float32),   # [h | p1 | p2 | 0...]
                pltpu.VMEM((N, N), jnp.float32),    # dense attention matrix accumulator
            ]),
        compiler_params=pltpu.CompilerParams(
            dimension_semantics=("arbitrary",)),
    )(x.astype(jnp.float32), W_big, er_aug, wra3, edge_idx)

    return out_padded[:, :F_out]


if __name__ == "__main__":
    key = jax.random.PRNGKey(0)
    N = 16                 # nodes; per the module comment, input node_feature is N x N
    in_features = N
    r_in_features = 8      # edge_r is E x 8
    out_features = 32
    E = 64
    alpha = 0.2            # LeakyReLU negative slope
    # dropout = 0.0 (eval semantics)

    ks = jax.random.split(key, 8)

    def xavier_normal(k, shape, gain=1.414):
        fan_in, fan_out = shape
        std = gain * (2.0 / (fan_in + fan_out)) ** 0.5
        return std * jax.random.normal(k, shape, jnp.float32)

    W = xavier_normal(ks[0], (in_features, out_features))
    Wr = xavier_normal(ks[1], (r_in_features, out_features))
    a = xavier_normal(ks[2], (1, 3 * out_features + 1))

    x = jax.random.normal(ks[3], (N, in_features), jnp.float32)
    edge_index = jax.random.randint(ks[4], (2, E), 0, N, jnp.int32)
    edge_weight_road = jax.random.uniform(ks[5], (E,), jnp.float32)
    edge_r = jax.random.normal(ks[6], (E, r_in_features), jnp.float32)

    out = self_gat_forward(x, W, Wr, a, edge_index, edge_weight_road, edge_r,
                           alpha=alpha, concat=True)
    out = jax.block_until_ready(out)

    # Pure-JAX reference (same math, scatter-add via .at[].add) for validation.
    h = x @ W
    r = edge_r @ Wr
    src = edge_index[0]
    dst = edge_index[1]
    a1 = a[0, :out_features]
    a2 = a[0, out_features:2 * out_features]
    a3 = a[0, 2 * out_features:3 * out_features]
    a4 = a[0, 3 * out_features]
    score = ((h[src] * a1).sum(-1) + (h[dst] * a2).sum(-1)
             + (r * a3).sum(-1) + a4 * edge_weight_road)
    lrelu = jnp.where(score > 0, score, alpha * score)
    ee = jnp.exp(-lrelu)
    e_rowsum = jnp.zeros((N, 1), jnp.float32).at[src].add(ee[:, None])
    numer = jnp.zeros((N, out_features), jnp.float32).at[src].add(ee[:, None] * h[dst])
    hp = numer / (e_rowsum + 9e-15)
    ref = jnp.where(hp > 0, hp, jnp.exp(jnp.minimum(hp, 0.0)) - 1.0)

    assert out.shape == (N, out_features)
    assert jnp.allclose(out, ref, atol=1e-4, rtol=1e-4), "mismatch vs reference"
    print("KERNEL_OK")
</pallas_src>

<mosaic_0001>
module attributes {stable_mosaic.version = 11 : i64} {
  func.func @_self_gat_kernel(%arg0: i32, %arg1: memref<16x16xf32, #tpu.memory_space<vmem>>, %arg2: memref<16x128xf32, #tpu.memory_space<vmem>>, %arg3: memref<64x9xf32, #tpu.memory_space<vmem>>, %arg4: memref<9x1xf32, #tpu.memory_space<vmem>>, %arg5: memref<64x2xi32, #tpu.memory_space<vmem>>, %arg6: memref<16x128xf32, #tpu.memory_space<vmem>>, %arg7: memref<16x128xf32, #tpu.memory_space<vmem>>, %arg8: memref<16x16xf32, #tpu.memory_space<vmem>>) attributes {dimension_semantics = [#tpu.dimension_semantics<arbitrary>], iteration_bounds = array<i64: 1>, scalar_prefetch = 0 : i64, scratch_operands = 2 : i64, tpu.core_type = #tpu.core_type<tc>, window_params = [{pipeline_mode = #tpu.pipeline_mode<synchronous>, transform_indices = @transform_0, window_bounds = array<i64: 16, 16>}, {pipeline_mode = #tpu.pipeline_mode<synchronous>, transform_indices = @transform_1, window_bounds = array<i64: 16, 128>}, {transform_indices = @transform_2, window_bounds = array<i64: 64, 9>}, {pipeline_mode = #tpu.pipeline_mode<synchronous>, transform_indices = @transform_3, window_bounds = array<i64: 9, 1>}, {transform_indices = @transform_4, window_bounds = array<i64: 64, 2>}, {pipeline_mode = #tpu.pipeline_mode<synchronous>, transform_indices = @transform_5, window_bounds = array<i64: 16, 128>}]} {
    %c0_i32 = arith.constant 0 : i32
    %0 = arith.cmpi eq, %arg0, %c0_i32 : i32
    %1 = arith.extui %0 : i1 to i32
    %c0_i32_0 = arith.constant 0 : i32
    %2 = arith.cmpi ne, %1, %c0_i32_0 : i32
    scf.if %2 {
      %c0_21 = arith.constant 0 : index
      %c0_22 = arith.constant 0 : index
      %40 = vector.load %arg1[%c0_21, %c0_22] : memref<16x16xf32, #tpu.memory_space<vmem>>, vector<16x16xf32>
      %c0_23 = arith.constant 0 : index
      %c0_24 = arith.constant 0 : index
      %41 = vector.load %arg2[%c0_23, %c0_24] : memref<16x128xf32, #tpu.memory_space<vmem>>, vector<16x128xf32>
      %cst_25 = arith.constant dense<0.000000e+00> : vector<16x128xf32>
      %42 = tpu.matmul %40, %41, %cst_25 {dimension_numbers = #tpu.dot_dimension_numbers<[1], [0], [0], [1], [0, 0, 1, 1], [], []>} : vector<16x16xf32>, vector<16x128xf32>, vector<16x128xf32> -> vector<16x128xf32>
      %c0_26 = arith.constant 0 : index
      %c0_27 = arith.constant 0 : index
      %43 = vector.load %arg7[%c0_26, %c0_27] : memref<16x128xf32, #tpu.memory_space<vmem>>, vector<16x128xf32>
      tpu.vector_store %arg7[%c0_26, %c0_27], %42 {strides = array<i32>} : memref<16x128xf32, #tpu.memory_space<vmem>>, vector<16x128xf32>,
      %cst_28 = arith.constant 0.000000e+00 : f32
      %44 = vector.broadcast %cst_28 : f32 to vector<16x16xf32>
      %c0_29 = arith.constant 0 : index
      %c0_30 = arith.constant 0 : index
      %45 = vector.load %arg8[%c0_29, %c0_30] : memref<16x16xf32, #tpu.memory_space<vmem>>, vector<16x16xf32>
      tpu.vector_store %arg8[%c0_29, %c0_30], %44 {strides = array<i32>} : memref<16x16xf32, #tpu.memory_space<vmem>>, vector<16x16xf32>,
    } else {
    }
    %c0 = arith.constant 0 : index
    %c32 = arith.constant 32 : index
    %3 = vector.load %arg7[%c0, %c32] : memref<16x128xf32, #tpu.memory_space<vmem>>, vector<16x1xf32>
    %c0_1 = arith.constant 0 : index
    %c33 = arith.constant 33 : index
    %4 = vector.load %arg7[%c0_1, %c33] : memref<16x128xf32, #tpu.memory_space<vmem>>, vector<16x1xf32>
    %c0_2 = arith.constant 0 : index
    %c0_3 = arith.constant 0 : index
    %5 = vector.load %arg5[%c0_2, %c0_3] : memref<64x2xi32, #tpu.memory_space<vmem>>, vector<64x1xi32>
    %c0_4 = arith.constant 0 : index
    %c1 = arith.constant 1 : index
    %6 = vector.load %arg5[%c0_4, %c1] : memref<64x2xi32, #tpu.memory_space<vmem>>, vector<64x1xi32>
    %7 = tpu.iota {dimensions = array<i32: 1>} : vector<64x16xi32>
    %8 = vector.broadcast %5 : vector<64x1xi32> to vector<64x16xi32>
    %9 = arith.cmpi eq, %8, %7 : vector<64x16xi32>
    %10 = arith.extui %9 : vector<64x16xi1> to vector<64x16xi32>
    %11 = arith.sitofp %10 : vector<64x16xi32> to vector<64x16xf32>
    %12 = vector.broadcast %6 : vector<64x1xi32> to vector<64x16xi32>
    %13 = arith.cmpi eq, %12, %7 : vector<64x16xi32>
    %14 = arith.extui %13 : vector<64x16xi1> to vector<64x16xi32>
    %15 = arith.sitofp %14 : vector<64x16xi32> to vector<64x16xf32>
    %cst = arith.constant dense<0.000000e+00> : vector<64x1xf32>
    %16 = tpu.matmul %11, %3, %cst {dimension_numbers = #tpu.dot_dimension_numbers<[1], [0], [0], [1], [0, 0, 1, 1], [], []>} : vector<64x16xf32>, vector<16x1xf32>, vector<64x1xf32> -> vector<64x1xf32>
    %cst_5 = arith.constant dense<0.000000e+00> : vector<64x1xf32>
    %17 = tpu.matmul %15, %4, %cst_5 {dimension_numbers = #tpu.dot_dimension_numbers<[1], [0], [0], [1], [0, 0, 1, 1], [], []>} : vector<64x16xf32>, vector<16x1xf32>, vector<64x1xf32> -> vector<64x1xf32>
    %18 = arith.addf %16, %17 : vector<64x1xf32>
    %c0_6 = arith.constant 0 : index
    %c0_7 = arith.constant 0 : index
    %19 = vector.load %arg3[%c0_6, %c0_7] : memref<64x9xf32, #tpu.memory_space<vmem>>, vector<64x9xf32>
    %c0_8 = arith.constant 0 : index
    %c0_9 = arith.constant 0 : index
    %20 = vector.load %arg4[%c0_8, %c0_9] : memref<9x1xf32, #tpu.memory_space<vmem>>, vector<9x1xf32>
    %cst_10 = arith.constant dense<0.000000e+00> : vector<64x1xf32>
    %21 = tpu.matmul %19, %20, %cst_10 {dimension_numbers = #tpu.dot_dimension_numbers<[1], [0], [0], [1], [0, 0, 1, 1], [], []>} : vector<64x9xf32>, vector<9x1xf32>, vector<64x1xf32> -> vector<64x1xf32>
    %22 = arith.addf %18, %21 : vector<64x1xf32>
    %cst_11 = arith.constant 0.000000e+00 : f32
    %23 = vector.broadcast %cst_11 : f32 to vector<64x1xf32>
    %24 = arith.cmpf ogt, %22, %23 : vector<64x1xf32>
    %cst_12 = arith.constant 2.000000e-01 : f32
    %25 = vector.broadcast %cst_12 : f32 to vector<64x1xf32>
    %26 = arith.mulf %25, %22 : vector<64x1xf32>
    %27 = arith.select %24, %22, %26 : vector<64x1xi1>, vector<64x1xf32>
    %cst_13 = arith.constant 0.000000e+00 : f32
    %28 = vector.broadcast %cst_13 : f32 to vector<64x1xf32>
    %29 = arith.subf %28, %27 : vector<64x1xf32>
    %30 = math.exp %29 : vector<64x1xf32>
    %c0_14 = arith.constant 0 : index
    %c0_15 = arith.constant 0 : index
    %31 = vector.load %arg8[%c0_14, %c0_15] : memref<16x16xf32, #tpu.memory_space<vmem>>, vector<16x16xf32>
    %32 = vector.broadcast %30 : vector<64x1xf32> to vector<64x16xf32>
    %33 = arith.mulf %11, %32 : vector<64x16xf32>
    %cst_16 = arith.constant dense<0.000000e+00> : vector<16x16xf32>
    %34 = tpu.matmul %33, %15, %cst_16 {dimension_numbers = #tpu.dot_dimension_numbers<[0], [0], [1], [1], [0, 1, 1, 1], [], []>} : vector<64x16xf32>, vector<64x16xf32>, vector<16x16xf32> -> vector<16x16xf32>
    %35 = arith.addf %31, %34 : vector<16x16xf32>
    %c0_17 = arith.constant 0 : index
    %c0_18 = arith.constant 0 : index
    %36 = vector.load %arg8[%c0_17, %c0_18] : memref<16x16xf32, #tpu.memory_space<vmem>>, vector<16x16xf32>
    tpu.vector_store %arg8[%c0_17, %c0_18], %35 {strides = array<i32>} : memref<16x16xf32, #tpu.memory_space<vmem>>, vector<16x16xf32>,
    %c0_i32_19 = arith.constant 0 : i32
    %37 = arith.cmpi eq, %arg0, %c0_i32_19 : i32
    %38 = arith.extui %37 : i1 to i32
    %c0_i32_20 = arith.constant 0 : i32
    %39 = arith.cmpi ne, %38, %c0_i32_20 : i32
    scf.if %39 {
      %c0_21 = arith.constant 0 : index
      %c0_22 = arith.constant 0 : index
      %40 = vector.load %arg7[%c0_21, %c0_22] : memref<16x128xf32, #tpu.memory_space<vmem>>, vector<16x128xf32>
      %41 = tpu.iota {dimensions = array<i32: 1>} : vector<16x128xi32>
      %c32_i32 = arith.constant 32 : i32
      %42 = vector.broadcast %c32_i32 : i32 to vector<16x128xi32>
      %43 = arith.cmpi eq, %41, %42 : vector<16x128xi32>
      %c32_i32_23 = arith.constant 32 : i32
      %44 = vector.broadcast %c32_i32_23 : i32 to vector<16x128xi32>
      %45 = arith.cmpi slt, %41, %44 : vector<16x128xi32>
      %cst_24 = arith.constant 0.000000e+00 : f32
      %46 = vector.broadcast %cst_24 : f32 to vector<16x128xf32>
      %47 = arith.select %45, %40, %46 : vector<16x128xi1>, vector<16x128xf32>
      %cst_25 = arith.constant 1.000000e+00 : f32
      %48 = vector.broadcast %cst_25 : f32 to vector<16x128xf32>
      %49 = arith.select %43, %48, %47 : vector<16x128xi1>, vector<16x128xf32>
      %c0_26 = arith.constant 0 : index
      %c0_27 = arith.constant 0 : index
      %50 = vector.load %arg8[%c0_26, %c0_27] : memref<16x16xf32, #tpu.memory_space<vmem>>, vector<16x16xf32>
      %cst_28 = arith.constant dense<0.000000e+00> : vector<16x128xf32>
      %51 = tpu.matmul %50, %49, %cst_28 {dimension_numbers = #tpu.dot_dimension_numbers<[1], [0], [0], [1], [0, 0, 1, 1], [], []>} : vector<16x16xf32>, vector<16x128xf32>, vector<16x128xf32> -> vector<16x128xf32>
      %52 = vector.extract_strided_slice %51 {offsets = [0, 32], sizes = [16, 1], strides = [1, 1]} : vector<16x128xf32> to vector<16x1xf32>
      %cst_29 = arith.constant 9.000000e-15 : f32
      %53 = vector.broadcast %cst_29 : f32 to vector<16x1xf32>
      %54 = arith.addf %52, %53 : vector<16x1xf32>
      %55 = tpu.reciprocal %54 : vector<16x1xf32> -> vector<16x1xf32>
      %56 = vector.broadcast %55 : vector<16x1xf32> to vector<16x128xf32>
      %57 = arith.mulf %51, %56 : vector<16x128xf32>
      %cst_30 = arith.constant 0.000000e+00 : f32
      %58 = vector.broadcast %cst_30 : f32 to vector<16x128xf32>
      %59 = arith.cmpf ogt, %57, %58 : vector<16x128xf32>
      %cst_31 = arith.constant 0.000000e+00 : f32
      %60 = vector.broadcast %cst_31 : f32 to vector<16x128xf32>
      %61 = arith.minimumf %57, %60 : vector<16x128xf32>
      %62 = math.exp %61 : vector<16x128xf32>
      %cst_32 = arith.constant 1.000000e+00 : f32
      %63 = vector.broadcast %cst_32 : f32 to vector<16x128xf32>
      %64 = arith.subf %62, %63 : vector<16x128xf32>
      %65 = arith.select %59, %57, %64 : vector<16x128xi1>, vector<16x128xf32>
      %c0_33 = arith.constant 0 : index
      %c0_34 = arith.constant 0 : index
      %66 = vector.load %arg6[%c0_33, %c0_34] : memref<16x128xf32, #tpu.memory_space<vmem>>, vector<16x128xf32>
      tpu.vector_store %arg6[%c0_33, %c0_34], %65 {strides = array<i32>} : memref<16x128xf32, #tpu.memory_space<vmem>>, vector<16x128xf32>,
    } else {
    }
    return
  }
  func.func @transform_0(%arg0: i32) -> (i32, i32) {
    %c0_i32 = arith.constant 0 : i32
    %c0_i32_0 = arith.constant 0 : i32
    %c0_i32_1 = arith.constant 0 : i32
    return %c0_i32, %c0_i32_0 : i32, i32
  }
  func.func @transform_1(%arg0: i32) -> (i32, i32) {
    %c0_i32 = arith.constant 0 : i32
    %c0_i32_0 = arith.constant 0 : i32
    %c0_i32_1 = arith.constant 0 : i32
    return %c0_i32, %c0_i32_0 : i32, i32
  }
  func.func @transform_2(%arg0: i32) -> (i32, i32) {
    %c0_i32 = arith.constant 0 : i32
    %c0_i32_0 = arith.constant 0 : i32
    return %arg0, %c0_i32 : i32, i32
  }
  func.func @transform_3(%arg0: i32) -> (i32, i32) {
    %c0_i32 = arith.constant 0 : i32
    %c0_i32_0 = arith.constant 0 : i32
    %c0_i32_1 = arith.constant 0 : i32
    return %c0_i32, %c0_i32_0 : i32, i32
  }
  func.func @transform_4(%arg0: i32) -> (i32, i32) {
    %c0_i32 = arith.constant 0 : i32
    %c0_i32_0 = arith.constant 0 : i32
    return %arg0, %c0_i32 : i32, i32
  }
  func.func @transform_5(%arg0: i32) -> (i32, i32) {
    %c0_i32 = arith.constant 0 : i32
    %c0_i32_0 = arith.constant 0 : i32
    %c0_i32_1 = arith.constant 0 : i32
    return %c0_i32, %c0_i32_0 : i32, i32
  }
}

</mosaic_0001>

<llo_original>
// kernel: tpu_custom_call.1
$region0: #{tpu_custom_call.1}
  #allocation0 [shape = 'u32[]', space=smem, size = 0x4, offset = 0x4, fixed_abs, tag = 'smem constant byte address 0x4 - core index']
  #allocation1 [shape = 'u32[144,128]{1,0:T(1,128)}', space=vmem, size = 0x12000, scoped, tag = 'internal scratch']
  #allocation2 [shape = 'f32[16,128]{1,0:T(8,128)}', space=vmem, size = 0x2000, scoped, tag = 'scratch operand']
  #allocation3 [shape = 'f32[16,16]{1,0:T(8,128)}', space=vmem, size = 0x2000, scoped, tag = 'scratch operand']
  %s0 = inlined_call_operand.vmem [shape: f32[16,16], index: 0, kind: input, shape index: {}]
  %s1 = inlined_call_operand.vmem [shape: f32[16,128], index: 1, kind: input, shape index: {}]
  %s2 = inlined_call_operand.vmem [shape: f32[64,9], index: 2, kind: input, shape index: {}]
  %s3 = inlined_call_operand.vmem [shape: f32[9,1], index: 3, kind: input, shape index: {}]
  %s4 = inlined_call_operand.vmem [shape: s32[64,2], index: 4, kind: input, shape index: {}]
  %s5 = inlined_call_operand.hbm [shape: f32[16,128], index: 5, kind: output, shape index: {}]
  %s6 = sld [smem:[#allocation0]]
  $region38: #{tpu_custom_call.1} parent=0
    _
  %s8 = ssub.s32 1, %s6
  %s9 = scalar_select 0, %s8, %s6
  $region1: #{tpu_custom_call.1} parent=0
    #allocation4 [shape = 'u8[8192]{0}', space=vmem, size = 0x2000, scoped, tag = 'output window, operand 0, single buffered']
    #allocation5 [shape = 's32[1]{0}', space=sflag, size = 0x4, scoped, tag = 'scoped memory for tpu_custom_call.1']
    %10 = vsyncpa [#allocation5], 0
    // Predicated region
    $region2: #{tpu_custom_call.1} parent=1 // pred_check
      _
    $region3: #{tpu_custom_call.1} parent=1 // pred_check_branch
      %12 = sbr.rel (0) target = $region5
    $region4: #{tpu_custom_call.1} parent=1 // pred_region
      _
    $region5: #{tpu_custom_call.1} parent=1 // pred_fallthru
      _
    // Predicated region
    $region6: #{tpu_custom_call.1} parent=1 // pred_check
      _
    $region7: #{tpu_custom_call.1} parent=1 // pred_check_branch
      %14 = sbr.rel (0) target = $region9
    $region8: #{tpu_custom_call.1} parent=1 // pred_region
      _
    $region9: #{tpu_custom_call.1} parent=1 // pred_fallthru
      _
    // Predicated region
    $region10: #{tpu_custom_call.1} parent=1 // pred_check
      _
    $region11: #{tpu_custom_call.1} parent=1 // pred_check_branch
      %16 = sbr.rel (0) target = $region13
    $region12: #{tpu_custom_call.1} parent=1 // pred_region
      _
    $region13: #{tpu_custom_call.1} parent=1 // pred_fallthru
      _
    // Predicated region
    $region14: #{tpu_custom_call.1} parent=1 // pred_check
      _
    $region15: #{tpu_custom_call.1} parent=1 // pred_check_branch
      %18 = sbr.rel (0) target = $region17
    $region16: #{tpu_custom_call.1} parent=1 // pred_region
      _
    $region17: #{tpu_custom_call.1} parent=1 // pred_fallthru
      _
    // Predicated region
    $region18: #{tpu_custom_call.1} parent=1 // pred_check
      _
    $region19: #{tpu_custom_call.1} parent=1 // pred_check_branch
      %20 = sbr.rel (0) target = $region21
    $region20: #{tpu_custom_call.1} parent=1 // pred_region
      _
    $region21: #{tpu_custom_call.1} parent=1 // pred_fallthru
      _
    %p21 = scmp.eq.s32.totalorder 0, 0
    // Predicated region
    $region22: #{tpu_custom_call.1} parent=1 // pred_check
      %p22 = pneg %p21
    $region23: #{tpu_custom_call.1} parent=1 // pred_check_branch
      %24 = sbr.rel (%p22) target = $region25
    $region24: #{tpu_custom_call.1} parent=1 // pred_region
      %v25 = vld [vmem:[%s0] sm:$0xff]
      %v26 = vld [vmem:[%s0 + $0x8] sm:$0xff]
      %v27 = vld [vmem:[%s1] sm:$0xff]
      %v28 = vld [vmem:[%s1 + $0x8] sm:$0xff]
      %vm29 = vcmask 130048
      %v31 = vsel %vm29, %v25, 0
      %v34 = vsel %vm29, %v26, 0
      %36 = vmatprep.subr.mxu0 0.0
      %37 = vmatpush1.msra.mxu0 %v27
      %38 = vmatprep.subr.mxu0 0.0
      %39 = vmatpush1.msra.mxu0 %v28
      %40 = vmatprep.subr.mxu0 0.0
      %41 = vmatpush1.msra.mxu0 0.0
      %42 = vmatprep.subr.mxu0 0.0
      %43 = vmatpush1.msra.mxu0 0.0
      %44 = vmatprep.subr.mxu0 0.0
      %45 = vmatpush1.msra.mxu0 0.0
      %46 = vmatprep.subr.mxu0 0.0
      %47 = vmatpush1.msra.mxu0 0.0
      %48 = vmatprep.subr.mxu0 0.0
      %49 = vmatpush1.msra.mxu0 0.0
      %50 = vmatprep.subr.mxu0 0.0
      %51 = vmatpush1.msra.mxu0 0.0
      %52 = vmatprep.subr.mxu0 0.0
      %53 = vmatpush1.msra.mxu0 0.0
      %54 = vmatprep.subr.mxu0 0.0
      %55 = vmatpush1.msra.mxu0 0.0
      %56 = vmatprep.subr.mxu0 0.0
      %57 = vmatpush1.msra.mxu0 0.0
      %58 = vmatprep.subr.mxu0 0.0
      %59 = vmatpush1.msra.mxu0 0.0
      %60 = vmatprep.subr.mxu0 0.0
      %61 = vmatpush1.msra.mxu0 0.0
      %62 = vmatprep.subr.mxu0 0.0
      %63 = vmatpush1.msra.mxu0 0.0
      %64 = vmatprep.subr.mxu0 0.0
      %65 = vmatpush1.msra.mxu0 0.0
      %66 = vmatprep.subr.mxu0 0.0
      %67 = vmatpush1.msra.mxu0 0.0
      %68 = vmatprep.subr.mxu0 0.0
      %69 = vmatpush1.msra.mxu0 0.0
      %70 = vmatprep.subr.mxu0 0.0
      %71 = vmatpush1.msra.mxu0 0.0
      %72 = vmatprep.subr.mxu0 0.0
      %73 = vmatpush1.msra.mxu0 0.0
      %74 = vmatprep.subr.mxu0 0.0
      %75 = vmatpush1.msra.mxu0 0.0
      %76 = vmatprep.subr.mxu0 0.0
      %77 = vmatpush1.msra.mxu0 0.0
      %78 = vmatprep.subr.mxu0 0.0
      %79 = vmatpush1.msra.mxu0 0.0
      %80 = vmatprep.subr.mxu0 0.0
      %81 = vmatpush1.msra.mxu0 0.0
      %82 = vmatprep.subr.mxu0 0.0
      %83 = vmatpush1.msra.mxu0 0.0
      %84 = vmatprep.subr.mxu0 0.0
      %85 = vmatpush1.msra.mxu0 0.0
      %86 = vmatprep.subr.mxu0 0.0
      %87 = vmatpush1.msra.mxu0 0.0
      %88 = vmatprep.subr.mxu0 0.0
      %89 = vmatpush1.msra.mxu0 0.0
      %90 = vmatprep.subr.mxu0 0.0
      %91 = vmatpush1.msra.mxu0 0.0
      %92 = vmatprep.subr.mxu0 0.0
      %93 = vmatpush1.msra.mxu0 0.0
      %94 = vmatprep.subr.mxu0 0.0
      %95 = vmatpush1.msra.mxu0 0.0
      %96 = vmatprep.subr.mxu0 0.0
      %97 = vmatpush1.msra.mxu0 0.0
      %98 = vmatprep.subr.mxu0 0.0
      %99 = vmatpush1.msra.mxu0 0.0
      %100 = vmatprep.mubr.f32.mxu0 0.0
      %101 = vmatmul.mubr.f32.gmra.mrb[0].mxu0 %v31
      %v102 = vpop.f32.mrb[0].mxu0
      %v103 = vadd.f32 0.0, %v102
      %v104 = vpop.f32.mrb[0].mxu0
      %105 = vmatprep.mubr.f32.mxu0 0.0
      %106 = vmatmul.mubr.f32.gmra.mrb[0].mxu0 %v34
      %v107 = vpop.f32.mrb[0].mxu0
      %v108 = vadd.f32 0.0, %v107
      %v109 = vpop.f32.mrb[0].mxu0
      %110 = vdwg.mxu0
      %111 = vst [vmem:[#allocation2] sm:$0xff] %v103
      %112 = vst [vmem:[#allocation2 + $0x8] sm:$0xff] %v108
      %113 = vst.msk [vmem:[#allocation3] sm:$0xff] %vm29, 0.0
      %114 = vst.msk [vmem:[#allocation3 + $0x8] sm:$0xff] %vm29, 0.0
    $region25: #{tpu_custom_call.1} parent=1 // pred_fallthru
      _
    %v115 = vld [vmem:[#allocation2] sm:$0xff]
    %v116 = vld [vmem:[#allocation2 + $0x8] sm:$0xff]
    %v117 = vld [vmem:[%s4] sm:$0xff]
    %v118 = vld [vmem:[%s4 + $0x8] sm:$0xff]
    %v119 = vld [vmem:[%s4 + $0x10] sm:$0xff]
    %v120 = vld [vmem:[%s4 + $0x18] sm:$0xff]
    %v121 = vld [vmem:[%s4 + $0x20] sm:$0xff]
    %v122 = vld [vmem:[%s4 + $0x28] sm:$0xff]
    %v123 = vld [vmem:[%s4 + $0x30] sm:$0xff]
    %v124 = vld [vmem:[%s4 + $0x38] sm:$0xff]
    %v125 = vlaneseq
    %v126 = vand.u32 %v125, 127
    %127 = vset.pattern.permute.xlu0 0
    %128 = vperm.xlu0 %127, %v117
    %v129 = vpop.permute.xlu0 %128
    %130 = vset.pattern.permute.xlu0 0
    %131 = vperm.xlu0 %130, %v118
    %v132 = vpop.permute.xlu0 %131
    %133 = vset.pattern.permute.xlu0 0
    %134 = vperm.xlu0 %133, %v119
    %v135 = vpop.permute.xlu0 %134
    %136 = vset.pattern.permute.xlu0 0
    %137 = vperm.xlu0 %136, %v120
    %v138 = vpop.permute.xlu0 %137
    %139 = vset.pattern.permute.xlu0 0
    %140 = vperm.xlu0 %139, %v121
    %v141 = vpop.permute.xlu0 %140
    %142 = vset.pattern.permute.xlu0 0
    %143 = vperm.xlu0 %142, %v122
    %v144 = vpop.permute.xlu0 %143
    %145 = vset.pattern.permute.xlu0 0
    %146 = vperm.xlu0 %145, %v123
    %v147 = vpop.permute.xlu0 %146
    %148 = vset.pattern.permute.xlu0 0
    %149 = vperm.xlu0 %148, %v124
    %v150 = vpop.permute.xlu0 %149
    %vm151 = vcmp.eq.s32.totalorder %v129, %v126
    %vm152 = vcmp.eq.s32.totalorder %v132, %v126
    %vm153 = vcmp.eq.s32.totalorder %v135, %v126
    %vm154 = vcmp.eq.s32.totalorder %v138, %v126
    %vm155 = vcmp.eq.s32.totalorder %v141, %v126
    %vm156 = vcmp.eq.s32.totalorder %v144, %v126
    %vm157 = vcmp.eq.s32.totalorder %v147, %v126
    %vm158 = vcmp.eq.s32.totalorder %v150, %v126
    %v159 = vsel %vm151, 1, 0
    %v160 = vsel %vm152, 1, 0
    %v161 = vsel %vm153, 1, 0
    %v162 = vsel %vm154, 1, 0
    %v163 = vsel %vm155, 1, 0
    %v164 = vsel %vm156, 1, 0
    %v165 = vsel %vm157, 1, 0
    %v166 = vsel %vm158, 1, 0
    %v167 = vcvt.s32.f32 %v159
    %v168 = vcvt.s32.f32 %v160
    %v169 = vcvt.s32.f32 %v161
    %v170 = vcvt.s32.f32 %v162
    %v171 = vcvt.s32.f32 %v163
    %v172 = vcvt.s32.f32 %v164
    %v173 = vcvt.s32.f32 %v165
    %v174 = vcvt.s32.f32 %v166
    %175 = vset.pattern.permute.xlu0 1
    %176 = vperm.xlu0 %175, %v117
    %v177 = vpop.permute.xlu0 %176
    %178 = vset.pattern.permute.xlu0 1
    %179 = vperm.xlu0 %178, %v118
    %v180 = vpop.permute.xlu0 %179
    %181 = vset.pattern.permute.xlu0 1
    %182 = vperm.xlu0 %181, %v119
    %v183 = vpop.permute.xlu0 %182
    %184 = vset.pattern.permute.xlu0 1
    %185 = vperm.xlu0 %184, %v120
    %v186 = vpop.permute.xlu0 %185
    %187 = vset.pattern.permute.xlu0 1
    %188 = vperm.xlu0 %187, %v121
    %v189 = vpop.permute.xlu0 %188
    %190 = vset.pattern.permute.xlu0 1
    %191 = vperm.xlu0 %190, %v122
    %v192 = vpop.permute.xlu0 %191
    %193 = vset.pattern.permute.xlu0 1
    %194 = vperm.xlu0 %193, %v123
    %v195 = vpop.permute.xlu0 %194
    %196 = vset.pattern.permute.xlu0 1
    %197 = vperm.xlu0 %196, %v124
    %v198 = vpop.permute.xlu0 %197
    %vm199 = vcmp.eq.s32.totalorder %v177, %v126
    %vm200 = vcmp.eq.s32.totalorder %v180, %v126
    %vm201 = vcmp.eq.s32.totalorder %v183, %v126
    %vm202 = vcmp.eq.s32.totalorder %v186, %v126
    %vm203 = vcmp.eq.s32.totalorder %v189, %v126
    %vm204 = vcmp.eq.s32.totalorder %v192, %v126
    %vm205 = vcmp.eq.s32.totalorder %v195, %v126
    %vm206 = vcmp.eq.s32.totalorder %v198, %v126
    %v207 = vsel %vm199, 1, 0
    %v208 = vsel %vm200, 1, 0
    %v209 = vsel %vm201, 1, 0
    %v210 = vsel %vm202, 1, 0
    %v211 = vsel %vm203, 1, 0
    %v212 = vsel %vm204, 1, 0
    %v213 = vsel %vm205, 1, 0
    %v214 = vsel %vm206, 1, 0
    %v215 = vcvt.s32.f32 %v207
    %v216 = vcvt.s32.f32 %v208
    %v217 = vcvt.s32.f32 %v209
    %v218 = vcvt.s32.f32 %v210
    %v219 = vcvt.s32.f32 %v211
    %v220 = vcvt.s32.f32 %v212
    %v221 = vcvt.s32.f32 %v213
    %v222 = vcvt.s32.f32 %v214
    %225 = vrot.lane.b32.xlu0 %v115, 95
    %v226 = vpop.permute.xlu0 %225
    %227 = vrot.lane.b32.xlu0 %v116, 95
    %v228 = vpop.permute.xlu0 %227
    %vm231 = vcmask 130048
    %v233 = vsel %vm231, %v215, 0
    %v236 = vsel %vm231, %v216, 0
    %v239 = vsel %vm231, %v217, 0
    %v242 = vsel %vm231, %v218, 0
    %v245 = vsel %vm231, %v219, 0
    %v248 = vsel %vm231, %v220, 0
    %v251 = vsel %vm231, %v221, 0
    %v254 = vsel %vm231, %v222, 0
    %256 = vmatprep.subr.mxu0 0.0
    %257 = vmatpush1.msra.mxu0 %v226
    %258 = vmatprep.subr.mxu0 0.0
    %259 = vmatpush1.msra.mxu0 %v228
    %260 = vmatprep.subr.mxu0 0.0
    %261 = vmatpush1.msra.mxu0 0.0
    %262 = vmatprep.subr.mxu0 0.0
    %263 = vmatpush1.msra.mxu0 0.0
    %264 = vmatprep.subr.mxu0 0.0
    %265 = vmatpush1.msra.mxu0 0.0
    %266 = vmatprep.subr.mxu0 0.0
    %267 = vmatpush1.msra.mxu0 0.0
    %268 = vmatprep.subr.mxu0 0.0
    %269 = vmatpush1.msra.mxu0 0.0
    %270 = vmatprep.subr.mxu0 0.0
    %271 = vmatpush1.msra.mxu0 0.0
    %272 = vmatprep.subr.mxu0 0.0
    %273 = vmatpush1.msra.mxu0 0.0
    %274 = vmatprep.subr.mxu0 0.0
    %275 = vmatpush1.msra.mxu0 0.0
    %276 = vmatprep.subr.mxu0 0.0
    %277 = vmatpush1.msra.mxu0 0.0
    %278 = vmatprep.subr.mxu0 0.0
    %279 = vmatpush1.msra.mxu0 0.0
    %280 = vmatprep.subr.mxu0 0.0
    %281 = vmatpush1.msra.mxu0 0.0
    %282 = vmatprep.subr.mxu0 0.0
    %283 = vmatpush1.msra.mxu0 0.0
    %284 = vmatprep.subr.mxu0 0.0
    %285 = vmatpush1.msra.mxu0 0.0
    %286 = vmatprep.subr.mxu0 0.0
    %287 = vmatpush1.msra.mxu0 0.0
    %288 = vmatprep.subr.mxu0 0.0
    %289 = vmatpush1.msra.mxu0 0.0
    %290 = vmatprep.subr.mxu0 0.0
    %291 = vmatpush1.msra.mxu0 0.0
    %292 = vmatprep.subr.mxu0 0.0
    %293 = vmatpush1.msra.mxu0 0.0
    %294 = vmatprep.subr.mxu0 0.0
    %295 = vmatpush1.msra.mxu0 0.0
    %296 = vmatprep.subr.mxu0 0.0
    %297 = vmatpush1.msra.mxu0 0.0
    %298 = vmatprep.subr.mxu0 0.0
    %299 = vmatpush1.msra.mxu0 0.0
    %300 = vmatprep.subr.mxu0 0.0
    %301 = vmatpush1.msra.mxu0 0.0
    %302 = vmatprep.subr.mxu0 0.0
    %303 = vmatpush1.msra.mxu0 0.0
    %304 = vmatprep.subr.mxu0 0.0
    %305 = vmatpush1.msra.mxu0 0.0
    %306 = vmatprep.subr.mxu0 0.0
    %307 = vmatpush1.msra.mxu0 0.0
    %308 = vmatprep.subr.mxu0 0.0
    %309 = vmatpush1.msra.mxu0 0.0
    %310 = vmatprep.subr.mxu0 0.0
    %311 = vmatpush1.msra.mxu0 0.0
    %312 = vmatprep.subr.mxu0 0.0
    %313 = vmatpush1.msra.mxu0 0.0
    %314 = vmatprep.subr.mxu0 0.0
    %315 = vmatpush1.msra.mxu0 0.0
    %316 = vmatprep.subr.mxu0 0.0
    %317 = vmatpush1.msra.mxu0 0.0
    %318 = vmatprep.subr.mxu0 0.0
    %319 = vmatpush1.msra.mxu0 0.0
    %320 = vmatprep.mubr.f32.mxu0 0.0
    %321 = vmatmul.mubr.f32.gmra.mrb[0].mxu0 %v233
    %v322 = vpop.f32.mrb[0].mxu0
    %v323 = vadd.f32 0.0, %v322
    %v324 = vpop.f32.mrb[0].mxu0
    %325 = vmatprep.mubr.f32.mxu0 0.0
    %326 = vmatmul.mubr.f32.gmra.mrb[0].mxu0 %v236
    %v327 = vpop.f32.mrb[0].mxu0
    %v328 = vadd.f32 0.0, %v327
    %v329 = vpop.f32.mrb[0].mxu0
    %330 = vmatprep.mubr.f32.mxu0 0.0
    %331 = vmatmul.mubr.f32.gmra.mrb[0].mxu0 %v239
    %v332 = vpop.f32.mrb[0].mxu0
    %v333 = vadd.f32 0.0, %v332
    %v334 = vpop.f32.mrb[0].mxu0
    %335 = vmatprep.mubr.f32.mxu0 0.0
    %336 = vmatmul.mubr.f32.gmra.mrb[0].mxu0 %v242
    %v337 = vpop.f32.mrb[0].mxu0
    %v338 = vadd.f32 0.0, %v337
    %v339 = vpop.f32.mrb[0].mxu0
    %340 = vmatprep.mubr.f32.mxu0 0.0
    %341 = vmatmul.mubr.f32.gmra.mrb[0].mxu0 %v245
    %v342 = vpop.f32.mrb[0].mxu0
    %v343 = vadd.f32 0.0, %v342
    %v344 = vpop.f32.mrb[0].mxu0
    %345 = vmatprep.mubr.f32.mxu0 0.0
    %346 = vmatmul.mubr.f32.gmra.mrb[0].mxu0 %v248
    %v347 = vpop.f32.mrb[0].mxu0
    %v348 = vadd.f32 0.0, %v347
    %v349 = vpop.f32.mrb[0].mxu0
    %350 = vmatprep.mubr.f32.mxu0 0.0
    %351 = vmatmul.mubr.f32.gmra.mrb[0].mxu0 %v251
    %v352 = vpop.f32.mrb[0].mxu0
    %v353 = vadd.f32 0.0, %v352
    %v354 = vpop.f32.mrb[0].mxu0
    %355 = vmatprep.mubr.f32.mxu0 0.0
    %356 = vmatmul.mubr.f32.gmra.mrb[0].mxu0 %v254
    %v357 = vpop.f32.mrb[0].mxu0
    %v358 = vadd.f32 0.0, %v357
    %v359 = vpop.f32.mrb[0].mxu0
    %360 = vdwg.mxu0
    %361 = vrot.lane.b32.xlu0 %v115, 96
    %v362 = vpop.permute.xlu0 %361
    %363 = vrot.lane.b32.xlu0 %v116, 96
    %v364 = vpop.permute.xlu0 %363
    %v368 = vsel %vm231, %v167, 0
    %v371 = vsel %vm231, %v168, 0
    %v374 = vsel %vm231, %v169, 0
    %v377 = vsel %vm231, %v170, 0
    %v380 = vsel %vm231, %v171, 0
    %v383 = vsel %vm231, %v172, 0
    %v386 = vsel %vm231, %v173, 0
    %v389 = vsel %vm231, %v174, 0
    %391 = vmatprep.subr.mxu0 0.0
    %392 = vmatpush1.msra.mxu0 %v362
    %393 = vmatprep.subr.mxu0 0.0
    %394 = vmatpush1.msra.mxu0 %v364
    %395 = vmatprep.subr.mxu0 0.0
    %396 = vmatpush1.msra.mxu0 0.0
    %397 = vmatprep.subr.mxu0 0.0
    %398 = vmatpush1.msra.mxu0 0.0
    %399 = vmatprep.subr.mxu0 0.0
    %400 = vmatpush1.msra.mxu0 0.0
    %401 = vmatprep.subr.mxu0 0.0
    %402 = vmatpush1.msra.mxu0 0.0
    %403 = vmatprep.subr.mxu0 0.0
    %404 = vmatpush1.msra.mxu0 0.0
    %405 = vmatprep.subr.mxu0 0.0
    %406 = vmatpush1.msra.mxu0 0.0
    %407 = vmatprep.subr.mxu0 0.0
    %408 = vmatpush1.msra.mxu0 0.0
    %409 = vmatprep.subr.mxu0 0.0
    %410 = vmatpush1.msra.mxu0 0.0
    %411 = vmatprep.subr.mxu0 0.0
    %412 = vmatpush1.msra.mxu0 0.0
    %413 = vmatprep.subr.mxu0 0.0
    %414 = vmatpush1.msra.mxu0 0.0
    %415 = vmatprep.subr.mxu0 0.0
    %416 = vmatpush1.msra.mxu0 0.0
    %417 = vmatprep.subr.mxu0 0.0
    %418 = vmatpush1.msra.mxu0 0.0
    %419 = vmatprep.subr.mxu0 0.0
    %420 = vmatpush1.msra.mxu0 0.0
    %421 = vmatprep.subr.mxu0 0.0
    %422 = vmatpush1.msra.mxu0 0.0
    %423 = vmatprep.subr.mxu0 0.0
    %424 = vmatpush1.msra.mxu0 0.0
    %425 = vmatprep.subr.mxu0 0.0
    %426 = vmatpush1.msra.mxu0 0.0
    %427 = vmatprep.subr.mxu0 0.0
    %428 = vmatpush1.msra.mxu0 0.0
    %429 = vmatprep.subr.mxu0 0.0
    %430 = vmatpush1.msra.mxu0 0.0
    %431 = vmatprep.subr.mxu0 0.0
    %432 = vmatpush1.msra.mxu0 0.0
    %433 = vmatprep.subr.mxu0 0.0
    %434 = vmatpush1.msra.mxu0 0.0
    %435 = vmatprep.subr.mxu0 0.0
    %436 = vmatpush1.msra.mxu0 0.0
    %437 = vmatprep.subr.mxu0 0.0
    %438 = vmatpush1.msra.mxu0 0.0
    %439 = vmatprep.subr.mxu0 0.0
    %440 = vmatpush1.msra.mxu0 0.0
    %441 = vmatprep.subr.mxu0 0.0
    %442 = vmatpush1.msra.mxu0 0.0
    %443 = vmatprep.subr.mxu0 0.0
    %444 = vmatpush1.msra.mxu0 0.0
    %445 = vmatprep.subr.mxu0 0.0
    %446 = vmatpush1.msra.mxu0 0.0
    %447 = vmatprep.subr.mxu0 0.0
    %448 = vmatpush1.msra.mxu0 0.0
    %449 = vmatprep.subr.mxu0 0.0
    %450 = vmatpush1.msra.mxu0 0.0
    %451 = vmatprep.subr.mxu0 0.0
    %452 = vmatpush1.msra.mxu0 0.0
    %453 = vmatprep.subr.mxu0 0.0
    %454 = vmatpush1.msra.mxu0 0.0
    %455 = vmatprep.mubr.f32.mxu0 0.0
    %456 = vmatmul.mubr.f32.gmra.mrb[0].mxu0 %v368
    %v457 = vpop.f32.mrb[0].mxu0
    %v458 = vadd.f32 %v323, %v457
    %v459 = vpop.f32.mrb[0].mxu0
    %460 = vmatprep.mubr.f32.mxu0 0.0
    %461 = vmatmul.mubr.f32.gmra.mrb[0].mxu0 %v371
    %v462 = vpop.f32.mrb[0].mxu0
    %v463 = vadd.f32 %v328, %v462
    %v464 = vpop.f32.mrb[0].mxu0
    %465 = vmatprep.mubr.f32.mxu0 0.0
    %466 = vmatmul.mubr.f32.gmra.mrb[0].mxu0 %v374
    %v467 = vpop.f32.mrb[0].mxu0
    %v468 = vadd.f32 %v333, %v467
    %v469 = vpop.f32.mrb[0].mxu0
    %470 = vmatprep.mubr.f32.mxu0 0.0
    %471 = vmatmul.mubr.f32.gmra.mrb[0].mxu0 %v377
    %v472 = vpop.f32.mrb[0].mxu0
    %v473 = vadd.f32 %v338, %v472
    %v474 = vpop.f32.mrb[0].mxu0
    %475 = vmatprep.mubr.f32.mxu0 0.0
    %476 = vmatmul.mubr.f32.gmra.mrb[0].mxu0 %v380
    %v477 = vpop.f32.mrb[0].mxu0
    %v478 = vadd.f32 %v343, %v477
    %v479 = vpop.f32.mrb[0].mxu0
    %480 = vmatprep.mubr.f32.mxu0 0.0
    %481 = vmatmul.mubr.f32.gmra.mrb[0].mxu0 %v383
    %v482 = vpop.f32.mrb[0].mxu0
    %v483 = vadd.f32 %v348, %v482
    %v484 = vpop.f32.mrb[0].mxu0
    %485 = vmatprep.mubr.f32.mxu0 0.0
    %486 = vmatmul.mubr.f32.gmra.mrb[0].mxu0 %v386
    %v487 = vpop.f32.mrb[0].mxu0
    %v488 = vadd.f32 %v353, %v487
    %v489 = vpop.f32.mrb[0].mxu0
    %490 = vmatprep.mubr.f32.mxu0 0.0
    %491 = vmatmul.mubr.f32.gmra.mrb[0].mxu0 %v389
    %v492 = vpop.f32.mrb[0].mxu0
    %v493 = vadd.f32 %v358, %v492
    %v494 = vpop.f32.mrb[0].mxu0
    %495 = vdwg.mxu0
    %v496 = vld [vmem:[%s2] sm:$0xff]
    %v497 = vld [vmem:[%s2 + $0x8] sm:$0xff]
    %v498 = vld [vmem:[%s2 + $0x10] sm:$0xff]
    %v499 = vld [vmem:[%s2 + $0x18] sm:$0xff]
    %v500 = vld [vmem:[%s2 + $0x20] sm:$0xff]
    %v501 = vld [vmem:[%s2 + $0x28] sm:$0xff]
    %v502 = vld [vmem:[%s2 + $0x30] sm:$0xff]
    %v503 = vld [vmem:[%s2 + $0x38] sm:$0xff]
    %v504 = vld [vmem:[%s3] sm:$0xff]
    %v505 = vld [vmem:[%s3 + $0x8] sm:$0x1]
    %vm506 = vcmask 72704
    %v508 = vsel %vm506, %v496, 0
    %v511 = vsel %vm506, %v497, 0
    %v514 = vsel %vm506, %v498, 0
    %v517 = vsel %vm506, %v499, 0
    %v520 = vsel %vm506, %v500, 0
    %v523 = vsel %vm506, %v501, 0
    %v526 = vsel %vm506, %v502, 0
    %v529 = vsel %vm506, %v503, 0
    %vm531 = vcmask 1040384
    %v533 = vsel %vm531, %v505, 0
    %535 = vmatprep.subr.mxu0 0.0
    %536 = vmatpush1.msra.mxu0 %v504
    %537 = vmatprep.subr.mxu0 0.0
    %538 = vmatpush1.msra.mxu0 %v533
    %539 = vmatprep.subr.mxu0 0.0
    %540 = vmatpush1.msra.mxu0 0.0
    %541 = vmatprep.subr.mxu0 0.0
    %542 = vmatpush1.msra.mxu0 0.0
    %543 = vmatprep.subr.mxu0 0.0
    %544 = vmatpush1.msra.mxu0 0.0
    %545 = vmatprep.subr.mxu0 0.0
    %546 = vmatpush1.msra.mxu0 0.0
    %547 = vmatprep.subr.mxu0 0.0
    %548 = vmatpush1.msra.mxu0 0.0
    %549 = vmatprep.subr.mxu0 0.0
    %550 = vmatpush1.msra.mxu0 0.0
    %551 = vmatprep.subr.mxu0 0.0
    %552 = vmatpush1.msra.mxu0 0.0
    %553 = vmatprep.subr.mxu0 0.0
    %554 = vmatpush1.msra.mxu0 0.0
    %555 = vmatprep.subr.mxu0 0.0
    %556 = vmatpush1.msra.mxu0 0.0
    %557 = vmatprep.subr.mxu0 0.0
    %558 = vmatpush1.msra.mxu0 0.0
    %559 = vmatprep.subr.mxu0 0.0
    %560 = vmatpush1.msra.mxu0 0.0
    %561 = vmatprep.subr.mxu0 0.0
    %562 = vmatpush1.msra.mxu0 0.0
    %563 = vmatprep.subr.mxu0 0.0
    %564 = vmatpush1.msra.mxu0 0.0
    %565 = vmatprep.subr.mxu0 0.0
    %566 = vmatpush1.msra.mxu0 0.0
    %567 = vmatprep.subr.mxu0 0.0
    %568 = vmatpush1.msra.mxu0 0.0
    %569 = vmatprep.subr.mxu0 0.0
    %570 = vmatpush1.msra.mxu0 0.0
    %571 = vmatprep.subr.mxu0 0.0
    %572 = vmatpush1.msra.mxu0 0.0
    %573 = vmatprep.subr.mxu0 0.0
    %574 = vmatpush1.msra.mxu0 0.0
    %575 = vmatprep.subr.mxu0 0.0
    %576 = vmatpush1.msra.mxu0 0.0
    %577 = vmatprep.subr.mxu0 0.0
    %578 = vmatpush1.msra.mxu0 0.0
    %579 = vmatprep.subr.mxu0 0.0
    %580 = vmatpush1.msra.mxu0 0.0
    %581 = vmatprep.subr.mxu0 0.0
    %582 = vmatpush1.msra.mxu0 0.0
    %583 = vmatprep.subr.mxu0 0.0
    %584 = vmatpush1.msra.mxu0 0.0
    %585 = vmatprep.subr.mxu0 0.0
    %586 = vmatpush1.msra.mxu0 0.0
    %587 = vmatprep.subr.mxu0 0.0
    %588 = vmatpush1.msra.mxu0 0.0
    %589 = vmatprep.subr.mxu0 0.0
    %590 = vmatpush1.msra.mxu0 0.0
    %591 = vmatprep.subr.mxu0 0.0
    %592 = vmatpush1.msra.mxu0 0.0
    %593 = vmatprep.subr.mxu0 0.0
    %594 = vmatpush1.msra.mxu0 0.0
    %595 = vmatprep.subr.mxu0 0.0
    %596 = vmatpush1.msra.mxu0 0.0
    %597 = vmatprep.subr.mxu0 0.0
    %598 = vmatpush1.msra.mxu0 0.0
    %599 = vmatprep.mubr.f32.mxu0 0.0
    %600 = vmatmul.mubr.f32.gmra.mrb[0].mxu0 %v508
    %v601 = vpop.f32.mrb[0].mxu0
    %v602 = vadd.f32 0.0, %v601
    %v603 = vpop.f32.mrb[0].mxu0
    %604 = vmatprep.mubr.f32.mxu0 0.0
    %605 = vmatmul.mubr.f32.gmra.mrb[0].mxu0 %v511
    %v606 = vpop.f32.mrb[0].mxu0
    %v607 = vadd.f32 0.0, %v606
    %v608 = vpop.f32.mrb[0].mxu0
    %609 = vmatprep.mubr.f32.mxu0 0.0
    %610 = vmatmul.mubr.f32.gmra.mrb[0].mxu0 %v514
    %v611 = vpop.f32.mrb[0].mxu0
    %v612 = vadd.f32 0.0, %v611
    %v613 = vpop.f32.mrb[0].mxu0
    %614 = vmatprep.mubr.f32.mxu0 0.0
    %615 = vmatmul.mubr.f32.gmra.mrb[0].mxu0 %v517
    %v616 = vpop.f32.mrb[0].mxu0
    %v617 = vadd.f32 0.0, %v616
    %v618 = vpop.f32.mrb[0].mxu0
    %619 = vmatprep.mubr.f32.mxu0 0.0
    %620 = vmatmul.mubr.f32.gmra.mrb[0].mxu0 %v520
    %v621 = vpop.f32.mrb[0].mxu0
    %v622 = vadd.f32 0.0, %v621
    %v623 = vpop.f32.mrb[0].mxu0
    %624 = vmatprep.mubr.f32.mxu0 0.0
    %625 = vmatmul.mubr.f32.gmra.mrb[0].mxu0 %v523
    %v626 = vpop.f32.mrb[0].mxu0
    %v627 = vadd.f32 0.0, %v626
    %v628 = vpop.f32.mrb[0].mxu0
    %629 = vmatprep.mubr.f32.mxu0 0.0
    %630 = vmatmul.mubr.f32.gmra.mrb[0].mxu0 %v526
    %v631 = vpop.f32.mrb[0].mxu0
    %v632 = vadd.f32 0.0, %v631
    %v633 = vpop.f32.mrb[0].mxu0
    %634 = vmatprep.mubr.f32.mxu0 0.0
    %635 = vmatmul.mubr.f32.gmra.mrb[0].mxu0 %v529
    %v636 = vpop.f32.mrb[0].mxu0
    %v637 = vadd.f32 0.0, %v636
    %v638 = vpop.f32.mrb[0].mxu0
    %639 = vdwg.mxu0
    %v640 = vadd.f32 %v458, %v602
    %v641 = vadd.f32 %v463, %v607
    %v642 = vadd.f32 %v468, %v612
    %v643 = vadd.f32 %v473, %v617
    %v644 = vadd.f32 %v478, %v622
    %v645 = vadd.f32 %v483, %v627
    %v646 = vadd.f32 %v488, %v632
    %v647 = vadd.f32 %v493, %v637
    %vm648 = vcmp.gt.f32.partialorder %v640, 0.0
    %vm649 = vcmp.gt.f32.partialorder %v641, 0.0
    %vm650 = vcmp.gt.f32.partialorder %v642, 0.0
    %vm651 = vcmp.gt.f32.partialorder %v643, 0.0
    %vm652 = vcmp.gt.f32.partialorder %v644, 0.0
    %vm653 = vcmp.gt.f32.partialorder %v645, 0.0
    %vm654 = vcmp.gt.f32.partialorder %v646, 0.0
    %vm655 = vcmp.gt.f32.partialorder %v647, 0.0
    %v656 = vmul.f32 %v640, 0.2
    %v657 = vmul.f32 %v641, 0.2
    %v658 = vmul.f32 %v642, 0.2
    %v659 = vmul.f32 %v643, 0.2
    %v660 = vmul.f32 %v644, 0.2
    %v661 = vmul.f32 %v645, 0.2
    %v662 = vmul.f32 %v646, 0.2
    %v663 = vmul.f32 %v647, 0.2
    %v664 = vsel %vm648, %v640, %v656
    %v665 = vsel %vm649, %v641, %v657
    %v666 = vsel %vm650, %v642, %v658
    %v667 = vsel %vm651, %v643, %v659
    %v668 = vsel %vm652, %v644, %v660
    %v669 = vsel %vm653, %v645, %v661
    %v670 = vsel %vm654, %v646, %v662
    %v671 = vsel %vm655, %v647, %v663
    %v672 = vsub.f32 0.0, %v664
    %v673 = vsub.f32 0.0, %v665
    %v674 = vsub.f32 0.0, %v666
    %v675 = vsub.f32 0.0, %v667
    %v676 = vsub.f32 0.0, %v668
    %v677 = vsub.f32 0.0, %v669
    %v678 = vsub.f32 0.0, %v670
    %v679 = vsub.f32 0.0, %v671
    %v680 = vmul.f32 %v672, 1.442695
    %v681 = vpow.pop %v680
    %v682 = vmul.f32 %v673, 1.442695
    %v683 = vpow.pop %v682
    %v684 = vmul.f32 %v674, 1.442695
    %v685 = vpow.pop %v684
    %v686 = vmul.f32 %v675, 1.442695
    %v687 = vpow.pop %v686
    %v688 = vmul.f32 %v676, 1.442695
    %v689 = vpow.pop %v688
    %v690 = vmul.f32 %v677, 1.442695
    %v691 = vpow.pop %v690
    %v692 = vmul.f32 %v678, 1.442695
    %v693 = vpow.pop %v692
    %v694 = vmul.f32 %v679, 1.442695
    %v695 = vpow.pop %v694
    %v696 = vld [vmem:[#allocation3] sm:$0xff]
    %v697 = vld [vmem:[#allocation3 + $0x8] sm:$0xff]
    %699 = vset.pattern.permute.xlu0 0
    %700 = vperm.xlu0 %699, %v681
    %v701 = vpop.permute.xlu0 %700
    %704 = vset.pattern.permute.xlu0 0
    %705 = vperm.xlu0 %704, %v683
    %v706 = vpop.permute.xlu0 %705
    %709 = vset.pattern.permute.xlu0 0
    %710 = vperm.xlu0 %709, %v685
    %v711 = vpop.permute.xlu0 %710
    %714 = vset.pattern.permute.xlu0 0
    %715 = vperm.xlu0 %714, %v687
    %v716 = vpop.permute.xlu0 %715
    %719 = vset.pattern.permute.xlu0 0
    %720 = vperm.xlu0 %719, %v689
    %v721 = vpop.permute.xlu0 %720
    %724 = vset.pattern.permute.xlu0 0
    %725 = vperm.xlu0 %724, %v691
    %v726 = vpop.permute.xlu0 %725
    %729 = vset.pattern.permute.xlu0 0
    %730 = vperm.xlu0 %729, %v693
    %v731 = vpop.permute.xlu0 %730
    %734 = vset.pattern.permute.xlu0 0
    %735 = vperm.xlu0 %734, %v695
    %v736 = vpop.permute.xlu0 %735
    %v738 = vmul.f32 %v167, %v701
    %v739 = vmul.f32 %v168, %v706
    %v740 = vmul.f32 %v169, %v711
    %v741 = vmul.f32 %v170, %v716
    %v742 = vmul.f32 %v171, %v721
    %v743 = vmul.f32 %v172, %v726
    %v744 = vmul.f32 %v173, %v731
    %v745 = vmul.f32 %v174, %v736
    %746 = vxpose.xlu0.b32.start [1/16] %v738, 128
    %747 = vxpose.xlu0.b32.cont [2/16] %v739, 128
    %748 = vxpose.xlu0.b32.cont [3/16] %v740, 128
    %749 = vxpose.xlu0.b32.cont [4/16] %v741, 128
    %750 = vxpose.xlu0.b32.cont [5/16] %v742, 128
    %751 = vxpose.xlu0.b32.cont [6/16] %v743, 128
    %752 = vxpose.xlu0.b32.cont [7/16] %v744, 128
    %753 = vxpose.xlu0.b32.cont [8/16] %v745, 128
    %754 = vxpose.xlu0.b32.cont [9/16] 0.0, 128
    %755 = vxpose.xlu0.b32.cont [10/16] 0.0, 128
    %756 = vxpose.xlu0.b32.cont [11/16] 0.0, 128
    %757 = vxpose.xlu0.b32.cont [12/16] 0.0, 128
    %758 = vxpose.xlu0.b32.cont [13/16] 0.0, 128
    %759 = vxpose.xlu0.b32.cont [14/16] 0.0, 128
    %760 = vxpose.xlu0.b32.cont [15/16] 0.0, 128
    %761 = vxpose.xlu0.b32.end [16/16] 0.0, 128
    %v762 = vpop.trf.xlu0
    %v763 = vpop.trf.xlu0
    %v764 = vpop.trf.xlu0
    %v765 = vpop.trf.xlu0
    %v766 = vpop.trf.xlu0
    %v767 = vpop.trf.xlu0
    %v768 = vpop.trf.xlu0
    %v769 = vpop.trf.xlu0
    %v770 = vpop.trf.xlu0
    %v771 = vpop.trf.xlu0
    %v772 = vpop.trf.xlu0
    %v773 = vpop.trf.xlu0
    %v774 = vpop.trf.xlu0
    %v775 = vpop.trf.xlu0
    %v776 = vpop.trf.xlu0
    %v777 = vpop.trf.xlu0
    %vm778 = vcmask 523264
    %v780 = vsel %vm778, %v762, 0
    %v783 = vsel %vm778, %v763, 0
    %785 = vmatprep.subr.mxu0 0.0
    %786 = vmatpush1.msra.mxu0 %v215
    %787 = vmatprep.subr.mxu0 0.0
    %788 = vmatpush1.msra.mxu0 %v216
    %789 = vmatprep.subr.mxu0 0.0
    %790 = vmatpush1.msra.mxu0 %v217
    %791 = vmatprep.subr.mxu0 0.0
    %792 = vmatpush1.msra.mxu0 %v218
    %793 = vmatprep.subr.mxu0 0.0
    %794 = vmatpush1.msra.mxu0 %v219
    %795 = vmatprep.subr.mxu0 0.0
    %796 = vmatpush1.msra.mxu0 %v220
    %797 = vmatprep.subr.mxu0 0.0
    %798 = vmatpush1.msra.mxu0 %v221
    %799 = vmatprep.subr.mxu0 0.0
    %800 = vmatpush1.msra.mxu0 %v222
    %801 = vmatprep.subr.mxu0 0.0
    %802 = vmatpush1.msra.mxu0 0.0
    %803 = vmatprep.subr.mxu0 0.0
    %804 = vmatpush1.msra.mxu0 0.0
    %805 = vmatprep.subr.mxu0 0.0
    %806 = vmatpush1.msra.mxu0 0.0
    %807 = vmatprep.subr.mxu0 0.0
    %808 = vmatpush1.msra.mxu0 0.0
    %809 = vmatprep.subr.mxu0 0.0
    %810 = vmatpush1.msra.mxu0 0.0
    %811 = vmatprep.subr.mxu0 0.0
    %812 = vmatpush1.msra.mxu0 0.0
    %813 = vmatprep.subr.mxu0 0.0
    %814 = vmatpush1.msra.mxu0 0.0
    %815 = vmatprep.subr.mxu0 0.0
    %816 = vmatpush1.msra.mxu0 0.0
    %817 = vmatprep.subr.mxu0 0.0
    %818 = vmatpush1.msra.mxu0 0.0
    %819 = vmatprep.subr.mxu0 0.0
    %820 = vmatpush1.msra.mxu0 0.0
    %821 = vmatprep.subr.mxu0 0.0
    %822 = vmatpush1.msra.mxu0 0.0
    %823 = vmatprep.subr.mxu0 0.0
    %824 = vmatpush1.msra.mxu0 0.0
    %825 = vmatprep.subr.mxu0 0.0
    %826 = vmatpush1.msra.mxu0 0.0
    %827 = vmatprep.subr.mxu0 0.0
    %828 = vmatpush1.msra.mxu0 0.0
    %829 = vmatprep.subr.mxu0 0.0
    %830 = vmatpush1.msra.mxu0 0.0
    %831 = vmatprep.subr.mxu0 0.0
    %832 = vmatpush1.msra.mxu0 0.0
    %833 = vmatprep.subr.mxu0 0.0
    %834 = vmatpush1.msra.mxu0 0.0
    %835 = vmatprep.subr.mxu0 0.0
    %836 = vmatpush1.msra.mxu0 0.0
    %837 = vmatprep.subr.mxu0 0.0
    %838 = vmatpush1.msra.mxu0 0.0
    %839 = vmatprep.subr.mxu0 0.0
    %840 = vmatpush1.msra.mxu0 0.0
    %841 = vmatprep.subr.mxu0 0.0
    %842 = vmatpush1.msra.mxu0 0.0
    %843 = vmatprep.subr.mxu0 0.0
    %844 = vmatpush1.msra.mxu0 0.0
    %845 = vmatprep.subr.mxu0 0.0
    %846 = vmatpush1.msra.mxu0 0.0
    %847 = vmatprep.subr.mxu0 0.0
    %848 = vmatpush1.msra.mxu0 0.0
    %849 = vmatprep.mubr.f32.mxu0 0.0
    %850 = vmatmul.mubr.f32.gmra.mrb[0].mxu0 %v780
    %v851 = vpop.f32.mrb[0].mxu0
    %v852 = vadd.f32 0.0, %v851
    %v853 = vpop.f32.mrb[0].mxu0
    %854 = vmatprep.mubr.f32.mxu0 0.0
    %855 = vmatmul.mubr.f32.gmra.mrb[0].mxu0 %v783
    %v856 = vpop.f32.mrb[0].mxu0
    %v857 = vadd.f32 0.0, %v856
    %v858 = vpop.f32.mrb[0].mxu0
    %859 = vdwg.mxu0
    %v860 = vadd.f32 %v696, %v852
    %v861 = vadd.f32 %v697, %v857
    %862 = vst.msk [vmem:[#allocation3] sm:$0xff] %vm231, %v860
    %863 = vst.msk [vmem:[#allocation3 + $0x8] sm:$0xff] %vm231, %v861
    // Predicated region
    $region26: #{tpu_custom_call.1} parent=1 // pred_check
      %p864 = pneg %p21
    $region27: #{tpu_custom_call.1} parent=1 // pred_check_branch
      %866 = sbr.rel (%p864) target = $region29
    $region28: #{tpu_custom_call.1} parent=1 // pred_region
      %v867 = vld [vmem:[#allocation2] sm:$0xff]
      %v868 = vld [vmem:[#allocation2 + $0x8] sm:$0xff]
      %vm869 = vcmp.eq.s32.totalorder %v126, 32
      %vm870 = vcmp.lt.s32.totalorder %v126, 32
      %v871 = vsel %vm870, %v867, 0.0
      %v872 = vsel %vm870, %v868, 0.0
      %v873 = vsel %vm869, 1.0, %v871
      %v874 = vsel %vm869, 1.0, %v872
      %v875 = vld [vmem:[#allocation3] sm:$0xff]
      %v876 = vld [vmem:[#allocation3 + $0x8] sm:$0xff]
      %v878 = vsel %vm231, %v875, 0
      %v881 = vsel %vm231, %v876, 0
      %883 = vmatprep.subr.mxu0 0.0
      %884 = vmatpush1.msra.mxu0 %v873
      %885 = vmatprep.subr.mxu0 0.0
      %886 = vmatpush1.msra.mxu0 %v874
      %887 = vmatprep.subr.mxu0 0.0
      %888 = vmatpush1.msra.mxu0 0.0
      %889 = vmatprep.subr.mxu0 0.0
      %890 = vmatpush1.msra.mxu0 0.0
      %891 = vmatprep.subr.mxu0 0.0
      %892 = vmatpush1.msra.mxu0 0.0
      %893 = vmatprep.subr.mxu0 0.0
      %894 = vmatpush1.msra.mxu0 0.0
      %895 = vmatprep.subr.mxu0 0.0
      %896 = vmatpush1.msra.mxu0 0.0
      %897 = vmatprep.subr.mxu0 0.0
      %898 = vmatpush1.msra.mxu0 0.0
      %899 = vmatprep.subr.mxu0 0.0
      %900 = vmatpush1.msra.mxu0 0.0
      %901 = vmatprep.subr.mxu0 0.0
      %902 = vmatpush1.msra.mxu0 0.0
      %903 = vmatprep.subr.mxu0 0.0
      %904 = vmatpush1.msra.mxu0 0.0
      %905 = vmatprep.subr.mxu0 0.0
      %906 = vmatpush1.msra.mxu0 0.0
      %907 = vmatprep.subr.mxu0 0.0
      %908 = vmatpush1.msra.mxu0 0.0
      %909 = vmatprep.subr.mxu0 0.0
      %910 = vmatpush1.msra.mxu0 0.0
      %911 = vmatprep.subr.mxu0 0.0
      %912 = vmatpush1.msra.mxu0 0.0
      %913 = vmatprep.subr.mxu0 0.0
      %914 = vmatpush1.msra.mxu0 0.0
      %915 = vmatprep.subr.mxu0 0.0
      %916 = vmatpush1.msra.mxu0 0.0
      %917 = vmatprep.subr.mxu0 0.0
      %918 = vmatpush1.msra.mxu0 0.0
      %919 = vmatprep.subr.mxu0 0.0
      %920 = vmatpush1.msra.mxu0 0.0
      %921 = vmatprep.subr.mxu0 0.0
      %922 = vmatpush1.msra.mxu0 0.0
      %923 = vmatprep.subr.mxu0 0.0
      %924 = vmatpush1.msra.mxu0 0.0
      %925 = vmatprep.subr.mxu0 0.0
      %926 = vmatpush1.msra.mxu0 0.0
      %927 = vmatprep.subr.mxu0 0.0
      %928 = vmatpush1.msra.mxu0 0.0
      %929 = vmatprep.subr.mxu0 0.0
      %930 = vmatpush1.msra.mxu0 0.0
      %931 = vmatprep.subr.mxu0 0.0
      %932 = vmatpush1.msra.mxu0 0.0
      %933 = vmatprep.subr.mxu0 0.0
      %934 = vmatpush1.msra.mxu0 0.0
      %935 = vmatprep.subr.mxu0 0.0
      %936 = vmatpush1.msra.mxu0 0.0
      %937 = vmatprep.subr.mxu0 0.0
      %938 = vmatpush1.msra.mxu0 0.0
      %939 = vmatprep.subr.mxu0 0.0
      %940 = vmatpush1.msra.mxu0 0.0
      %941 = vmatprep.subr.mxu0 0.0
      %942 = vmatpush1.msra.mxu0 0.0
      %943 = vmatprep.subr.mxu0 0.0
      %944 = vmatpush1.msra.mxu0 0.0
      %945 = vmatprep.subr.mxu0 0.0
      %946 = vmatpush1.msra.mxu0 0.0
      %947 = vmatprep.mubr.f32.mxu0 0.0
      %948 = vmatmul.mubr.f32.gmra.mrb[0].mxu0 %v878
      %v949 = vpop.f32.mrb[0].mxu0
      %v950 = vadd.f32 0.0, %v949
      %v951 = vpop.f32.mrb[0].mxu0
      %952 = vmatprep.mubr.f32.mxu0 0.0
      %953 = vmatmul.mubr.f32.gmra.mrb[0].mxu0 %v881
      %v954 = vpop.f32.mrb[0].mxu0
      %v955 = vadd.f32 0.0, %v954
      %v956 = vpop.f32.mrb[0].mxu0
      %957 = vdwg.mxu0
      %v958 = vadd.f32 %v950, 9e-15
      %v959 = vadd.f32 %v955, 9e-15
      %v960 = vrcp.pop %v958
      %v961 = vrcp.pop %v959
      %963 = vset.pattern.permute.xlu0 32
      %964 = vperm.xlu0 %963, %v960
      %v965 = vpop.permute.xlu0 %964
      %968 = vset.pattern.permute.xlu0 32
      %969 = vperm.xlu0 %968, %v961
      %v970 = vpop.permute.xlu0 %969
      %v972 = vmul.f32 %v950, %v965
      %v973 = vmul.f32 %v955, %v970
      %vm974 = vcmp.gt.f32.partialorder %v972, 0.0
      %vm975 = vcmp.gt.f32.partialorder %v973, 0.0
      %v976 = vmin.f32 %v972, 0.0
      %v977 = vmin.f32 %v973, 0.0
      %v978 = vmul.f32 %v976, 1.442695
      %v979 = vpow.pop %v978
      %v980 = vmul.f32 %v977, 1.442695
      %v981 = vpow.pop %v980
      %v982 = vsub.f32 %v979, 1.0
      %v983 = vsub.f32 %v981, 1.0
      %v984 = vsel %vm974, %v972, %v982
      %v985 = vsel %vm975, %v973, %v983
      %986 = vst [vmem:[#allocation4] sm:$0xff] %v984
      %987 = vst [vmem:[#allocation4 + $0x8] sm:$0xff] %v985
    $region29: #{tpu_custom_call.1} parent=1 // pred_fallthru
      _
    // Predicated region
    $region30: #{tpu_custom_call.1} parent=1 // pred_check
      _
    $region31: #{tpu_custom_call.1} parent=1 // pred_check_branch
      %989 = sbr.rel (0) target = $region33
    $region32: #{tpu_custom_call.1} parent=1 // pred_region
      %s991 = ssub.s32 256, 256
      %992 = vsyncadd [#allocation5], %s991
      %s993 = sshll.u32 [#allocation4], 4
      %s994 = int_to_ptr.vmem [resolvable:$true] %s993
      %999 = dma.vmem_to_hbm [thread:$0]  %s994, 256, %s5, [#allocation5], 128, 128, 8
    $region33: #{tpu_custom_call.1} parent=1 // pred_fallthru
      _
    // Predicated region
    $region34: #{tpu_custom_call.1} parent=1 // pred_check
      _
    $region35: #{tpu_custom_call.1} parent=1 // pred_check_branch
      %1001 = sbr.rel (0) target = $region37
    $region36: #{tpu_custom_call.1} parent=1 // pred_region
      %1002 = dma.done [#allocation5], 256
    $region37: #{tpu_custom_call.1} parent=1 // pred_fallthru
      _
    %1003 = vsyncpa [#allocation5], 1

</llo_original>
